<compile_context>
chip_gen: v6e
topology: v6e:2x2x1
jax: 0.10.0
libtpu: 0.0.40
codegen_flags: <defaults>
</compile_context>

<pallas_src>
import math

import jax
import jax.numpy as jnp
from jax import lax
from jax.experimental import pallas as pl
from jax.experimental.pallas import tpu as pltpu


def _embed_gather_kernel(ids_ref, w_hbm, out_ref, row_buf, sem):
    # ids_ref:  (n_tok_padded,) int32 token ids in SMEM (scalar prefetch)
    # w_hbm:    (V, E) embedding table, left in HBM (memory_space=pl.ANY)
    # out_ref:  (tb, E) output tile in VMEM (auto-pipelined)
    # row_buf:  (tb, E) VMEM scratch the row DMAs land in
    # sem:      scalar DMA semaphore (all row copies are equal-sized, so a
    #           single semaphore with one wait per copy drains them exactly)
    i = pl.program_id(0)
    tb = out_ref.shape[0]

    def issue(r, carry):
        tok = ids_ref[i * tb + r]
        pltpu.make_async_copy(
            w_hbm.at[pl.ds(tok, 1), :],
            row_buf.at[pl.ds(r, 1), :],
            sem,
        ).start()
        return carry

    lax.fori_loop(0, tb, issue, 0)

    def drain(r, carry):
        pltpu.make_async_copy(
            w_hbm.at[pl.ds(0, 1), :],       # shape-only; wait is on `sem`
            row_buf.at[pl.ds(r, 1), :],
            sem,
        ).wait()
        return carry

    lax.fori_loop(0, tb, drain, 0)

    out_ref[...] = row_buf[...]


def word_embedding(x, W_embed, tb=128):
    """Pallas DMA-gather equivalent of `W_embed[x]` for integer index array x."""
    orig_shape = x.shape
    V, E = W_embed.shape

    ids = x.reshape(-1).astype(jnp.int32)
    n_tok = ids.shape[0]

    # Token tile: multiple of 8 (sublane granularity), no larger than needed.
    tb = max(8, min(tb, ((n_tok + 7) // 8) * 8))
    n_pad = (-n_tok) % tb
    if n_pad:
        # Padded ids gather row 0; their rows are sliced off below.
        ids = jnp.pad(ids, (0, n_pad))
    n_tok_p = n_tok + n_pad
    n_blocks = n_tok_p // tb

    out = pl.pallas_call(
        _embed_gather_kernel,
        out_shape=jax.ShapeDtypeStruct((n_tok_p, E), W_embed.dtype),
        grid_spec=pltpu.PrefetchScalarGridSpec(
            num_scalar_prefetch=1,          # ids -> SMEM
            grid=(n_blocks,),
            in_specs=[
                pl.BlockSpec(memory_space=pl.ANY),      # table stays in HBM
            ],
            out_specs=pl.BlockSpec((tb, E), lambda i, ids_ref: (i, 0)),
            scratch_shapes=[
                pltpu.VMEM((tb, E), W_embed.dtype),     # gather landing buffer
                pltpu.SemaphoreType.DMA(()),            # shared row-DMA sem
            ],
        ),
        compiler_params=pltpu.CompilerParams(
            dimension_semantics=("parallel",),
        ),
    )(ids, W_embed)

    if n_pad:
        out = out[:n_tok]
    return out.reshape(*orig_shape, E)


if __name__ == "__main__":
    vocab_size = 16
    embed_size = 32
    N, T = 2, 8

    key = jax.random.PRNGKey(0)
    k_w, k_x = jax.random.split(key)

    # Deterministic parameter init matching torch.randn(...).div(sqrt(vocab_size))
    W_embed = (
        jax.random.normal(k_w, (vocab_size, embed_size), dtype=jnp.float32)
        / math.sqrt(vocab_size)
    )
    x = jax.random.randint(k_x, (N, T), 0, vocab_size, dtype=jnp.int32)

    out = word_embedding(x, W_embed)
    out = jax.block_until_ready(out)

    ref = W_embed[x]  # plain-JAX reference gather
    assert out.shape == (N, T, embed_size)
    assert jnp.allclose(out, ref, atol=1e-6), "mismatch vs reference gather"

    print("KERNEL_OK")
</pallas_src>

<mosaic_0001>
module attributes {stable_mosaic.version = 11 : i64} {
  func.func @_embed_gather_kernel(%arg0: i32, %arg1: memref<16xi32, #tpu.memory_space<smem>>, %arg2: memref<16x32xf32, #tpu.memory_space<any>>, %arg3: memref<16x32xf32, #tpu.memory_space<vmem>>, %arg4: memref<16x32xf32, #tpu.memory_space<vmem>>, %arg5: memref<!tpu.dma_semaphore, #tpu.memory_space<semaphore_mem>>) attributes {dimension_semantics = [#tpu.dimension_semantics<parallel>], iteration_bounds = array<i64: 1>, scalar_prefetch = 1 : i64, scratch_operands = 2 : i64, tpu.core_type = #tpu.core_type<tc>, window_params = [{}, {transform_indices = @transform_1, window_bounds = array<i64: 16, 32>}]} {
    %c0_i32 = arith.constant 0 : i32
    %c16_i32 = arith.constant 16 : i32
    %0 = arith.addi %c0_i32, %c16_i32 : i32
    %c1_i32 = arith.constant 1 : i32
    scf.for %arg6 = %c0_i32 to %0 step %c1_i32  : i32 {
      %c16_i32_8 = arith.constant 16 : i32
      %4 = arith.muli %arg0, %c16_i32_8 : i32
      %5 = arith.addi %4, %arg6 : i32
      %6 = arith.index_cast %5 : i32 to index
      %7 = memref.load %arg1[%6] : memref<16xi32, #tpu.memory_space<smem>>
      %c0_i32_9 = arith.constant 0 : i32
      %8 = tpu.memref_slice %arg2[%7, %c0_i32_9] : memref<16x32xf32, #tpu.memory_space<any>> -> memref<1x32xf32, #tpu.memory_space<any>>
      %c0_i32_10 = arith.constant 0 : i32
      %9 = tpu.memref_slice %arg4[%arg6, %c0_i32_10] : memref<16x32xf32, #tpu.memory_space<vmem>> -> memref<1x32xf32, #tpu.memory_space<vmem>>
      tpu.enqueue_dma source(%8 : memref<1x32xf32, #tpu.memory_space<any>>) target(%9 : memref<1x32xf32, #tpu.memory_space<vmem>>) target_semaphore(%arg5 : memref<!tpu.dma_semaphore, #tpu.memory_space<semaphore_mem>>)
    }
    %c16_i32_0 = arith.constant 16 : i32
    %c0_i32_1 = arith.constant 0 : i32
    %c16_i32_2 = arith.constant 16 : i32
    %1 = arith.addi %c0_i32_1, %c16_i32_2 : i32
    %c1_i32_3 = arith.constant 1 : i32
    scf.for %arg6 = %c0_i32_1 to %1 step %c1_i32_3  : i32 {
      %c0_i32_8 = arith.constant 0 : i32
      %c0_i32_9 = arith.constant 0 : i32
      %4 = tpu.memref_slice %arg2[%c0_i32_8, %c0_i32_9] : memref<16x32xf32, #tpu.memory_space<any>> -> memref<1x32xf32, #tpu.memory_space<any>>
      %c0_i32_10 = arith.constant 0 : i32
      %5 = tpu.memref_slice %arg4[%arg6, %c0_i32_10] : memref<16x32xf32, #tpu.memory_space<vmem>> -> memref<1x32xf32, #tpu.memory_space<vmem>>
      tpu.wait_dma2 semaphore(%arg5 : memref<!tpu.dma_semaphore, #tpu.memory_space<semaphore_mem>>) src(%4 : memref<1x32xf32, #tpu.memory_space<any>>) dst(%5 : memref<1x32xf32, #tpu.memory_space<vmem>>)
    }
    %c16_i32_4 = arith.constant 16 : i32
    %c0 = arith.constant 0 : index
    %c0_5 = arith.constant 0 : index
    %2 = vector.load %arg4[%c0, %c0_5] : memref<16x32xf32, #tpu.memory_space<vmem>>, vector<16x32xf32>
    %c0_6 = arith.constant 0 : index
    %c0_7 = arith.constant 0 : index
    %3 = vector.load %arg3[%c0_6, %c0_7] : memref<16x32xf32, #tpu.memory_space<vmem>>, vector<16x32xf32>
    tpu.vector_store %arg3[%c0_6, %c0_7], %2 {strides = array<i32>} : memref<16x32xf32, #tpu.memory_space<vmem>>, vector<16x32xf32>,
    return
  }
  func.func @transform_1(%arg0: i32, %arg1: memref<16xi32, #tpu.memory_space<smem>>) -> (i32, i32) {
    %c0_i32 = arith.constant 0 : i32
    %c0_i32_0 = arith.constant 0 : i32
    return %arg0, %c0_i32 : i32, i32
  }
}

</mosaic_0001>

<llo_original>
// kernel: tpu_custom_call.1
$region0: #{tpu_custom_call.1}
  #allocation0 [shape = 'u32[]', space=smem, size = 0x4, offset = 0x4, fixed_abs, tag = 'smem constant byte address 0x4 - core index']
  #allocation1 [shape = 'u32[144,128]{1,0:T(1,128)}', space=vmem, size = 0x12000, scoped, tag = 'internal scratch']
  #allocation2 [shape = 'f32[16,32]{1,0:T(8,128)}', space=vmem, size = 0x2000, scoped, tag = 'scratch operand']
  #allocation3 [shape = 's32[1]{0}', space=sflag, size = 0x4, scoped, tag = 'scratch operand']
  #allocation4 [shape = 's32[1]{0}', space=sflag, size = 0x4, scoped, tag = 'scoped memory for tpu_custom_call.1']
  #allocation5 [shape = 'u8[512]{0}', space=smem, size = 0x200, scoped, tag = 'prefetched SMEM operand 0']
  #allocation8 [shape = 's32[]', space=sflag, size = 0x4, offset = 0, fixed_abs, tag = 'sflag constant byte address 0x0 - dummy sync flag']
  #allocation9 [shape = 's32[]', space=sflag, size = 0x4, offset = 0, fixed_abs, tag = 'sflag constant byte address 0x0 - dummy sync flag']
  #allocation10 [shape = 'u32[]', space=smem, size = 0x4, offset = 0x44, fixed_abs, tag = 'smem constant byte address 0x44 - assertion arg 0']
  #allocation11 [shape = 'u32[]', space=smem, size = 0x4, offset = 0x48, fixed_abs, tag = 'smem constant byte address 0x48 - assertion arg 1']
  %s0 = inlined_call_operand.hbm [shape: s32[16], index: 0, kind: input, shape index: {}]
  %s1 = inlined_call_operand.hbm [shape: f32[16,32], index: 1, kind: input, shape index: {}]
  %s2 = inlined_call_operand.hbm [shape: f32[16,32], index: 2, kind: output, shape index: {}]
  %s3 = sld [smem:[#allocation0]]
  $region28: #{tpu_custom_call.1} parent=0
    _
  %s5 = ssub.s32 1, %s3
  %s6 = scalar_select 0, %s5, %s3
  %8 = dma.hbm_to_smem %s0, 16, [#allocation5], [#allocation4]
  %9 = dma.done [#allocation4], 16
  %10 = sfence
  $region1: #{tpu_custom_call.1} parent=0
    #allocation6 [shape = 'u8[8192]{0}', space=vmem, size = 0x2000, scoped, tag = 'output window, operand 0, single buffered']
    #allocation7 [shape = 's32[1]{0}', space=sflag, size = 0x4, scoped, tag = 'scoped memory for tpu_custom_call.1']
    %11 = vsyncpa [#allocation7], 0
    loop: start=0, step=1, limit=16
    $region2: #{tpu_custom_call.1} parent=1 // loop_pre_header
      _
    $region3: #{tpu_custom_call.1} parent=1 // loop_header
      %s13 = sphi 0, %s17
      %p14 = scmp.ge.s32.totalorder %s13, 16
    $region4: #{tpu_custom_call.1} parent=1 // loop_header_branch
      %16 = sbr.rel (%p14) target = $region8
    $region5: #{tpu_custom_call.1} parent=1 // loop_body
      %s18 = smul.u32 0, 16
      %s19 = sadd.s32 %s18, %s13
      %s20 = sld [smem:[#allocation5 + %s19]]
      %s21 = smul.addr %s20, 16
      %s22 = scalar_lea.hbm %s1, %s21
      %s23 = scalar_lea.vmem [#allocation2], %s13
      // Predicated region
      $region9: #{tpu_custom_call.1} parent=5 // pred_check
        _
      $region10: #{tpu_custom_call.1} parent=5 // pred_check_branch
        %25 = sbr.rel target = $region12
      $region11: #{tpu_custom_call.1} parent=5 // pred_region
        %26 = sst [smem:[#allocation10]] [#allocation9]
        %27 = sst [smem:[#allocation11]] [#allocation8]
      $region12: #{tpu_custom_call.1} parent=5 // pred_fallthru
        _
      %29 = shalt.err (0)
      %s31 = sshll.u32 %s23, 4
      %s32 = int_to_ptr.vmem [resolvable:$true] %s31
      %34 = dma.hbm_to_vmem [thread:$0]  %s22, 16, %s32, [#allocation3]
    $region6: #{tpu_custom_call.1} parent=1 // loop_footer
      %s17 = sadd.s32 1, %s13
    $region7: #{tpu_custom_call.1} parent=1 // loop_footer_branch
      %12 = sbr.rel target = $region3
    $region8: #{tpu_custom_call.1} parent=1 // loop_exit
      _
    loop: start=0, step=1, limit=16
    $region13: #{tpu_custom_call.1} parent=1 // loop_pre_header
      _
    $region14: #{tpu_custom_call.1} parent=1 // loop_header
      %s36 = sphi 0, %s40
      %p37 = scmp.ge.s32.totalorder %s36, 16
    $region15: #{tpu_custom_call.1} parent=1 // loop_header_branch
      %39 = sbr.rel (%p37) target = $region19
    $region16: #{tpu_custom_call.1} parent=1 // loop_body
      %s41 = smul.u32 1, 1
      %s42 = sshll.u32 %s41, 4
      %43 = dma.done [#allocation3], %s42
    $region17: #{tpu_custom_call.1} parent=1 // loop_footer
      %s40 = sadd.s32 1, %s36
    $region18: #{tpu_custom_call.1} parent=1 // loop_footer_branch
      %35 = sbr.rel target = $region14
    $region19: #{tpu_custom_call.1} parent=1 // loop_exit
      _
    %v44 = vld [vmem:[#allocation2] sm:$0xff]
    %v45 = vld [vmem:[#allocation2 + $0x8] sm:$0xff]
    %vm46 = vcmask 261120
    %47 = vst.msk [vmem:[#allocation6] sm:$0xff] %vm46, %v44
    %48 = vst.msk [vmem:[#allocation6 + $0x8] sm:$0xff] %vm46, %v45
    // Predicated region
    $region20: #{tpu_custom_call.1} parent=1 // pred_check
      _
    $region21: #{tpu_custom_call.1} parent=1 // pred_check_branch
      %50 = sbr.rel (0) target = $region23
    $region22: #{tpu_custom_call.1} parent=1 // pred_region
      %s52 = ssub.s32 256, 256
      %53 = vsyncadd [#allocation7], %s52
      %s54 = sshll.u32 [#allocation6], 4
      %s55 = int_to_ptr.vmem [resolvable:$true] %s54
      %60 = dma.vmem_to_hbm [thread:$0]  %s55, 256, %s2, [#allocation7], 128, 128, 8
    $region23: #{tpu_custom_call.1} parent=1 // pred_fallthru
      _
    // Predicated region
    $region24: #{tpu_custom_call.1} parent=1 // pred_check
      _
    $region25: #{tpu_custom_call.1} parent=1 // pred_check_branch
      %62 = sbr.rel (0) target = $region27
    $region26: #{tpu_custom_call.1} parent=1 // pred_region
      %63 = dma.done [#allocation7], 256
    $region27: #{tpu_custom_call.1} parent=1 // pred_fallthru
      _
    %64 = vsyncpa [#allocation7], 1
  %65 = vsyncmov [#allocation3]
  %s66 = vpop.sfrf %65
  %p67 = scmp.eq.s32.totalorder %s66, 0
  %p68 = pneg %p67
  %70 = shalt.err (%p68)

</llo_original>
